<compile_context>
chip_gen: v5e
topology: v5e:2x2
jax: 0.10.0
libtpu: 0.0.40
codegen_flags: <defaults>
</compile_context>

<pallas_src>
import functools

import jax
import jax.numpy as jnp
from jax.experimental import pallas as pl
from jax.experimental.pallas import tpu as pltpu

LANE = 128
SUBLANE_BF16 = 16  # bf16 packs two rows per sublane -> align batch / K dims to 16


def _round_up(x, m):
    return ((x + m - 1) // m) * m


def _mlp_kernel(x_ref, w1_ref, b1_ref, w2_ref, b2_ref, w3_ref, b3_ref, o_ref,
                *, out_cols, mm_dtype):
    # x arrives lane-unpadded (TB, in_size) f32: cast to the MXU dtype and
    # statically zero-extend the K dim here instead of materializing a
    # 128-lane padded copy in HBM.
    x = x_ref[...].astype(mm_dtype)
    k1 = w1_ref.shape[0]
    if x.shape[1] != k1:  # static; no-op when in_size is already 16-aligned
        x = jnp.pad(x, ((0, 0), (0, k1 - x.shape[1])))

    h1 = jnp.dot(x, w1_ref[...], preferred_element_type=jnp.float32)
    h1 = jnp.maximum(h1 + b1_ref[...], 0.0)
    h2 = jnp.dot(h1.astype(mm_dtype), w2_ref[...],
                 preferred_element_type=jnp.float32)
    h2 = jnp.maximum(h2 + b2_ref[...], 0.0)
    y = jnp.dot(h2.astype(mm_dtype), w3_ref[...],
                preferred_element_type=jnp.float32)
    # Narrow writeback: slice to the real output columns BEFORE the bias add,
    # store only out_cols f32 per row (DMA bytes drop ~16x vs 128-lane f32).
    b3 = b3_ref[...][:, :out_cols]
    o_ref[...] = (y[:, :out_cols] + b3).astype(o_ref.dtype)


def init_params(key, input_size, hidden_size, output_size=2):
    """Logical (unpadded) params; nn.Linear weights pre-transposed to (in, out),
    biases as (1, out)."""
    ks = jax.random.split(key, 6)

    def lin(kw, kb, fan_in, fan_out):
        bound = 1.0 / jnp.sqrt(fan_in)
        w = jax.random.uniform(kw, (fan_in, fan_out), jnp.float32, -bound, bound)
        b = jax.random.uniform(kb, (1, fan_out), jnp.float32, -bound, bound)
        return w, b

    w1, b1 = lin(ks[0], ks[1], input_size, hidden_size)
    w2, b2 = lin(ks[2], ks[3], hidden_size, hidden_size // 2)
    w3, b3 = lin(ks[4], ks[5], hidden_size // 2, output_size)
    return dict(w1=w1, b1=b1, w2=w2, b2=b2, w3=w3, b3=b3)


def prepare_params(params, matmul_dtype=jnp.bfloat16):
    """One-time packing: w1's K dim padded only to 16 (bf16 sublane multiple);
    all N dims and the deeper K dims padded to 128 lanes. Weights cast to the
    MXU dtype; biases stay f32 (bias add / ReLU run on the VPU in f32)."""

    def pad_w(w, k_mult, n_mult):
        di, do = w.shape
        wp = jnp.zeros((_round_up(di, k_mult), _round_up(do, n_mult)), matmul_dtype)
        return wp.at[:di, :do].set(w.astype(matmul_dtype))

    def pad_b(b):
        do = b.shape[-1]
        bp = jnp.zeros((1, _round_up(do, LANE)), jnp.float32)
        return bp.at[:, :do].set(b.reshape(1, do).astype(jnp.float32))

    return dict(
        w1=pad_w(params["w1"], SUBLANE_BF16, LANE), b1=pad_b(params["b1"]),
        w2=pad_w(params["w2"], LANE, LANE),         b2=pad_b(params["b2"]),
        w3=pad_w(params["w3"], LANE, LANE),         b3=pad_b(params["b3"]),
    )


@functools.partial(jax.jit, static_argnames=("out_size", "tile_b"))
def action_policy_forward(state, padded_params, out_size, tile_b=512):
    """state: (B, input_size) f32. padded_params: output of prepare_params."""
    w1, b1 = padded_params["w1"], padded_params["b1"]
    w2, b2 = padded_params["w2"], padded_params["b2"]
    w3, b3 = padded_params["w3"], padded_params["b3"]

    B, in_size = state.shape
    mm_dtype = w1.dtype
    out_cols = _round_up(out_size, 8)  # narrow output slab (== full array dim)

    # Batch tile: 16-aligned (bf16 sublane packing). Default 512 -> B=1000
    # gives 2 balanced tiles (both v7x TCs busy; only 2 steps on v5e/v6e).
    TB = min(tile_b, _round_up(B, SUBLANE_BF16))
    B_pad = _round_up(B, TB)
    n_tiles = B_pad // TB

    # Only pad batch rows (tiny); no lane padding of the input in HBM.
    x = state if B_pad == B else jnp.pad(state, ((0, B_pad - B), (0, 0)))

    def full(a):  # weights/biases: whole array VMEM-resident across the grid
        return pl.BlockSpec(a.shape, lambda i: (0, 0))

    flops = 2 * B_pad * (w1.shape[0] * w1.shape[1]
                         + w2.shape[0] * w2.shape[1]
                         + w3.shape[0] * w3.shape[1])
    bytes_accessed = (x.size * x.dtype.itemsize
                      + sum(a.size * a.dtype.itemsize
                            for a in (w1, b1, w2, b2, w3, b3))
                      + B_pad * out_cols * 4)

    kernel = functools.partial(_mlp_kernel, out_cols=out_cols, mm_dtype=mm_dtype)

    out = pl.pallas_call(
        kernel,
        out_shape=jax.ShapeDtypeStruct((B_pad, out_cols), jnp.float32),
        grid=(n_tiles,),
        in_specs=[
            pl.BlockSpec((TB, in_size), lambda i: (i, 0)),
            full(w1), full(b1), full(w2), full(b2), full(w3), full(b3),
        ],
        out_specs=pl.BlockSpec((TB, out_cols), lambda i: (i, 0)),
        compiler_params=pltpu.CompilerParams(
            dimension_semantics=("parallel",),  # v7x: shard batch tiles over both TCs
        ),
        cost_estimate=pl.CostEstimate(flops=flops, transcendentals=0,
                                      bytes_accessed=bytes_accessed),
    )(x, w1, b1, w2, b2, w3, b3)

    # Slice off batch padding and the few padded output columns.
    return out[:B, :out_size]


def reference_forward(state, params, matmul_dtype=jnp.float32):
    """Pure-JAX reference. With matmul_dtype=bfloat16 it mirrors the kernel's
    bf16-in / f32-accumulate matmul path exactly."""
    def dot(x, w):
        return jnp.dot(x.astype(matmul_dtype), w.astype(matmul_dtype),
                       preferred_element_type=jnp.float32)

    h1 = jnp.maximum(dot(state, params["w1"]) + params["b1"], 0.0)
    h2 = jnp.maximum(dot(h1, params["w2"]) + params["b2"], 0.0)
    return dot(h2, params["w3"]) + params["b3"]


if __name__ == "__main__":
    key = jax.random.PRNGKey(0)
    k_x, k_p, k_big = jax.random.split(key, 3)

    # Small shapes implied by the module.
    batch, input_size, hidden_size, output_size = 2, 16, 32, 2
    state = jax.random.normal(k_x, (batch, input_size), jnp.float32)

    params = init_params(k_p, input_size, hidden_size, output_size)
    padded = prepare_params(params)  # pad/cast weights once, at init time

    out = jax.block_until_ready(action_policy_forward(state, padded, output_size))
    assert out.shape == (batch, output_size)

    # Exact-path check (bf16 matmul inputs in both kernel and reference).
    ref_bf16 = reference_forward(state, params, matmul_dtype=jnp.bfloat16)
    assert jnp.allclose(out, ref_bf16, atol=1e-2, rtol=1e-2), "mismatch vs bf16-path reference"
    # Semantic check vs the full-f32 PyTorch-equivalent forward (bf16 rounding tolerance).
    ref_f32 = reference_forward(state, params, matmul_dtype=jnp.float32)
    assert jnp.allclose(out, ref_f32, atol=5e-2, rtol=5e-2), "mismatch vs f32 reference"

    # Batched path: two 512-row tiles (ragged tail zero-padded to 1024 rows).
    big_state = jax.random.normal(k_big, (1000, input_size), jnp.float32)
    big_out = jax.block_until_ready(action_policy_forward(big_state, padded, output_size))
    big_ref = reference_forward(big_state, params, matmul_dtype=jnp.bfloat16)
    assert big_out.shape == (1000, output_size)
    assert jnp.allclose(big_out, big_ref, atol=1e-2, rtol=1e-2), "mismatch on batched path"

    print("KERNEL_OK")
</pallas_src>

<mosaic_0001>
module attributes {stable_mosaic.version = 11 : i64} {
  func.func @_mlp_kernel(%arg0: i32, %arg1: memref<16x16xf32, #tpu.memory_space<vmem>>, %arg2: memref<16x128xbf16, #tpu.memory_space<vmem>>, %arg3: memref<1x128xf32, #tpu.memory_space<vmem>>, %arg4: memref<128x128xbf16, #tpu.memory_space<vmem>>, %arg5: memref<1x128xf32, #tpu.memory_space<vmem>>, %arg6: memref<128x128xbf16, #tpu.memory_space<vmem>>, %arg7: memref<1x128xf32, #tpu.memory_space<vmem>>, %arg8: memref<16x8xf32, #tpu.memory_space<vmem>>) attributes {dimension_semantics = [#tpu.dimension_semantics<parallel>], iteration_bounds = array<i64: 1>, scalar_prefetch = 0 : i64, scratch_operands = 0 : i64, tpu.core_type = #tpu.core_type<tc>, window_params = [{transform_indices = @transform_0, window_bounds = array<i64: 16, 16>}, {pipeline_mode = #tpu.pipeline_mode<synchronous>, transform_indices = @transform_1, window_bounds = array<i64: 16, 128>}, {pipeline_mode = #tpu.pipeline_mode<synchronous>, transform_indices = @transform_2, window_bounds = array<i64: 1, 128>}, {pipeline_mode = #tpu.pipeline_mode<synchronous>, transform_indices = @transform_3, window_bounds = array<i64: 128, 128>}, {pipeline_mode = #tpu.pipeline_mode<synchronous>, transform_indices = @transform_4, window_bounds = array<i64: 1, 128>}, {pipeline_mode = #tpu.pipeline_mode<synchronous>, transform_indices = @transform_5, window_bounds = array<i64: 128, 128>}, {pipeline_mode = #tpu.pipeline_mode<synchronous>, transform_indices = @transform_6, window_bounds = array<i64: 1, 128>}, {transform_indices = @transform_7, window_bounds = array<i64: 16, 8>}]} {
    %c0 = arith.constant 0 : index
    %c0_0 = arith.constant 0 : index
    %0 = vector.load %arg1[%c0, %c0_0] : memref<16x16xf32, #tpu.memory_space<vmem>>, vector<16x16xf32>
    %1 = arith.truncf %0 : vector<16x16xf32> to vector<16x16xbf16>
    %c0_1 = arith.constant 0 : index
    %c0_2 = arith.constant 0 : index
    %2 = vector.load %arg2[%c0_1, %c0_2] : memref<16x128xbf16, #tpu.memory_space<vmem>>, vector<16x128xbf16>
    %cst = arith.constant dense<0.000000e+00> : vector<16x128xf32>
    %3 = tpu.matmul %1, %2, %cst {dimension_numbers = #tpu.dot_dimension_numbers<[1], [0], [0], [1], [0, 0, 1, 1], [], []>} : vector<16x16xbf16>, vector<16x128xbf16>, vector<16x128xf32> -> vector<16x128xf32>
    %c0_3 = arith.constant 0 : index
    %c0_4 = arith.constant 0 : index
    %4 = vector.load %arg3[%c0_3, %c0_4] : memref<1x128xf32, #tpu.memory_space<vmem>>, vector<1x128xf32>
    %5 = vector.broadcast %4 : vector<1x128xf32> to vector<16x128xf32>
    %6 = arith.addf %3, %5 : vector<16x128xf32>
    %cst_5 = arith.constant 0.000000e+00 : f32
    %7 = vector.broadcast %cst_5 : f32 to vector<16x128xf32>
    %8 = arith.maximumf %6, %7 : vector<16x128xf32>
    %9 = arith.truncf %8 : vector<16x128xf32> to vector<16x128xbf16>
    %c0_6 = arith.constant 0 : index
    %c0_7 = arith.constant 0 : index
    %10 = vector.load %arg4[%c0_6, %c0_7] : memref<128x128xbf16, #tpu.memory_space<vmem>>, vector<128x128xbf16>
    %cst_8 = arith.constant dense<0.000000e+00> : vector<16x128xf32>
    %11 = tpu.matmul %9, %10, %cst_8 {dimension_numbers = #tpu.dot_dimension_numbers<[1], [0], [0], [1], [0, 0, 1, 1], [], []>} : vector<16x128xbf16>, vector<128x128xbf16>, vector<16x128xf32> -> vector<16x128xf32>
    %c0_9 = arith.constant 0 : index
    %c0_10 = arith.constant 0 : index
    %12 = vector.load %arg5[%c0_9, %c0_10] : memref<1x128xf32, #tpu.memory_space<vmem>>, vector<1x128xf32>
    %13 = vector.broadcast %12 : vector<1x128xf32> to vector<16x128xf32>
    %14 = arith.addf %11, %13 : vector<16x128xf32>
    %cst_11 = arith.constant 0.000000e+00 : f32
    %15 = vector.broadcast %cst_11 : f32 to vector<16x128xf32>
    %16 = arith.maximumf %14, %15 : vector<16x128xf32>
    %17 = arith.truncf %16 : vector<16x128xf32> to vector<16x128xbf16>
    %c0_12 = arith.constant 0 : index
    %c0_13 = arith.constant 0 : index
    %18 = vector.load %arg6[%c0_12, %c0_13] : memref<128x128xbf16, #tpu.memory_space<vmem>>, vector<128x128xbf16>
    %cst_14 = arith.constant dense<0.000000e+00> : vector<16x128xf32>
    %19 = tpu.matmul %17, %18, %cst_14 {dimension_numbers = #tpu.dot_dimension_numbers<[1], [0], [0], [1], [0, 0, 1, 1], [], []>} : vector<16x128xbf16>, vector<128x128xbf16>, vector<16x128xf32> -> vector<16x128xf32>
    %c0_15 = arith.constant 0 : index
    %c0_16 = arith.constant 0 : index
    %20 = vector.load %arg7[%c0_15, %c0_16] : memref<1x128xf32, #tpu.memory_space<vmem>>, vector<1x128xf32>
    %21 = vector.extract_strided_slice %20 {offsets = [0, 0], sizes = [1, 8], strides = [1, 1]} : vector<1x128xf32> to vector<1x8xf32>
    %22 = vector.extract_strided_slice %19 {offsets = [0, 0], sizes = [16, 8], strides = [1, 1]} : vector<16x128xf32> to vector<16x8xf32>
    %23 = vector.broadcast %21 : vector<1x8xf32> to vector<16x8xf32>
    %24 = arith.addf %22, %23 : vector<16x8xf32>
    %c0_17 = arith.constant 0 : index
    %c0_18 = arith.constant 0 : index
    %25 = vector.load %arg8[%c0_17, %c0_18] : memref<16x8xf32, #tpu.memory_space<vmem>>, vector<16x8xf32>
    tpu.vector_store %arg8[%c0_17, %c0_18], %24 {strides = array<i32>} : memref<16x8xf32, #tpu.memory_space<vmem>>, vector<16x8xf32>,
    return
  }
  func.func @transform_0(%arg0: i32) -> (i32, i32) {
    %c0_i32 = arith.constant 0 : i32
    %c0_i32_0 = arith.constant 0 : i32
    return %arg0, %c0_i32 : i32, i32
  }
  func.func @transform_1(%arg0: i32) -> (i32, i32) {
    %c0_i32 = arith.constant 0 : i32
    %c0_i32_0 = arith.constant 0 : i32
    %c0_i32_1 = arith.constant 0 : i32
    return %c0_i32, %c0_i32_0 : i32, i32
  }
  func.func @transform_2(%arg0: i32) -> (i32, i32) {
    %c0_i32 = arith.constant 0 : i32
    %c0_i32_0 = arith.constant 0 : i32
    %c0_i32_1 = arith.constant 0 : i32
    return %c0_i32, %c0_i32_0 : i32, i32
  }
  func.func @transform_3(%arg0: i32) -> (i32, i32) {
    %c0_i32 = arith.constant 0 : i32
    %c0_i32_0 = arith.constant 0 : i32
    %c0_i32_1 = arith.constant 0 : i32
    return %c0_i32, %c0_i32_0 : i32, i32
  }
  func.func @transform_4(%arg0: i32) -> (i32, i32) {
    %c0_i32 = arith.constant 0 : i32
    %c0_i32_0 = arith.constant 0 : i32
    %c0_i32_1 = arith.constant 0 : i32
    return %c0_i32, %c0_i32_0 : i32, i32
  }
  func.func @transform_5(%arg0: i32) -> (i32, i32) {
    %c0_i32 = arith.constant 0 : i32
    %c0_i32_0 = arith.constant 0 : i32
    %c0_i32_1 = arith.constant 0 : i32
    return %c0_i32, %c0_i32_0 : i32, i32
  }
  func.func @transform_6(%arg0: i32) -> (i32, i32) {
    %c0_i32 = arith.constant 0 : i32
    %c0_i32_0 = arith.constant 0 : i32
    %c0_i32_1 = arith.constant 0 : i32
    return %c0_i32, %c0_i32_0 : i32, i32
  }
  func.func @transform_7(%arg0: i32) -> (i32, i32) {
    %c0_i32 = arith.constant 0 : i32
    %c0_i32_0 = arith.constant 0 : i32
    return %arg0, %c0_i32 : i32, i32
  }
}

</mosaic_0001>

<llo_original>
// kernel: action_policy_forward.1
$region0: #{action_policy_forward.1}
  #allocation0 [shape = 'u32[]', space=smem, size = 0x4, offset = 0x4, fixed_abs, tag = 'smem constant byte address 0x4 - core index']
  #allocation1 [shape = 'u32[72,128]{1,0:T(1,128)}', space=vmem, size = 0x9000, scoped, tag = 'internal scratch']
  %s0 = inlined_call_operand.vmem [shape: f32[16,16], index: 0, kind: input, shape index: {}]
  %s1 = inlined_call_operand.vmem [shape: bf16[16,128], index: 1, kind: input, shape index: {}]
  %s2 = inlined_call_operand.vmem [shape: f32[1,128], index: 2, kind: input, shape index: {}]
  %s3 = inlined_call_operand.hbm [shape: bf16[128,128], index: 3, kind: input, shape index: {}]
  %s4 = inlined_call_operand.vmem [shape: f32[1,128], index: 4, kind: input, shape index: {}]
  %s5 = inlined_call_operand.hbm [shape: bf16[128,128], index: 5, kind: input, shape index: {}]
  %s6 = inlined_call_operand.vmem [shape: f32[1,128], index: 6, kind: input, shape index: {}]
  %s7 = inlined_call_operand.vmem [shape: f32[16,8], index: 7, kind: output, shape index: {}]
  %s8 = sld [smem:[#allocation0]]
  $region46: #{action_policy_forward.1} parent=0
    _
  %s10 = ssub.s32 1, %s8
  %s11 = scalar_select 0, %s10, %s8
  $region1: #{action_policy_forward.1} parent=0
    #allocation2 [shape = 'u8[32768]{0}', space=vmem, size = 0x8000, scoped, tag = 'input window, operand 3, single buffered']
    #allocation3 [shape = 's32[1]{0}', space=sflag, size = 0x4, scoped, tag = 'scoped memory for action_policy_forward.1']
    #allocation4 [shape = 'u8[32768]{0}', space=vmem, size = 0x8000, scoped, tag = 'input window, operand 5, single buffered']
    #allocation5 [shape = 's32[1]{0}', space=sflag, size = 0x4, scoped, tag = 'scoped memory for action_policy_forward.1']
    %12 = vsyncpa [#allocation3], 0
    %13 = vsyncpa [#allocation5], 0
    // Predicated region
    $region2: #{action_policy_forward.1} parent=1 // pred_check
      _
    $region3: #{action_policy_forward.1} parent=1 // pred_check_branch
      %15 = sbr.rel (0) target = $region5
    $region4: #{action_policy_forward.1} parent=1 // pred_region
      _
    $region5: #{action_policy_forward.1} parent=1 // pred_fallthru
      _
    // Predicated region
    $region6: #{action_policy_forward.1} parent=1 // pred_check
      _
    $region7: #{action_policy_forward.1} parent=1 // pred_check_branch
      %17 = sbr.rel (0) target = $region9
    $region8: #{action_policy_forward.1} parent=1 // pred_region
      _
    $region9: #{action_policy_forward.1} parent=1 // pred_fallthru
      _
    // Predicated region
    $region10: #{action_policy_forward.1} parent=1 // pred_check
      _
    $region11: #{action_policy_forward.1} parent=1 // pred_check_branch
      %19 = sbr.rel (0) target = $region13
    $region12: #{action_policy_forward.1} parent=1 // pred_region
      _
    $region13: #{action_policy_forward.1} parent=1 // pred_fallthru
      _
    // Predicated region
    $region14: #{action_policy_forward.1} parent=1 // pred_check
      _
    $region15: #{action_policy_forward.1} parent=1 // pred_check_branch
      %21 = sbr.rel (0) target = $region17
    $region16: #{action_policy_forward.1} parent=1 // pred_region
      %23 = vsyncadd [#allocation3], 0
      %s24 = sshll.u32 %s3, 4
      %s25 = int_to_ptr.hbm [resolvable:$true] %s24
      %s26 = sshll.u32 [#allocation2], 4
      %s27 = int_to_ptr.vmem [resolvable:$true] %s26
      %32 = dma.hbm_to_vmem [thread:$0]  %s25, 1024, %s27, [#allocation3], 64, 64, 4
    $region17: #{action_policy_forward.1} parent=1 // pred_fallthru
      _
    // Predicated region
    $region18: #{action_policy_forward.1} parent=1 // pred_check
      _
    $region19: #{action_policy_forward.1} parent=1 // pred_check_branch
      %34 = sbr.rel (0) target = $region21
    $region20: #{action_policy_forward.1} parent=1 // pred_region
      _
    $region21: #{action_policy_forward.1} parent=1 // pred_fallthru
      _
    // Predicated region
    $region22: #{action_policy_forward.1} parent=1 // pred_check
      _
    $region23: #{action_policy_forward.1} parent=1 // pred_check_branch
      %36 = sbr.rel (0) target = $region25
    $region24: #{action_policy_forward.1} parent=1 // pred_region
      %38 = vsyncadd [#allocation5], 0
      %s39 = sshll.u32 %s5, 4
      %s40 = int_to_ptr.hbm [resolvable:$true] %s39
      %s41 = sshll.u32 [#allocation4], 4
      %s42 = int_to_ptr.vmem [resolvable:$true] %s41
      %47 = dma.hbm_to_vmem [thread:$0]  %s40, 1024, %s42, [#allocation5], 64, 64, 4
    $region25: #{action_policy_forward.1} parent=1 // pred_fallthru
      _
    // Predicated region
    $region26: #{action_policy_forward.1} parent=1 // pred_check
      _
    $region27: #{action_policy_forward.1} parent=1 // pred_check_branch
      %49 = sbr.rel (0) target = $region29
    $region28: #{action_policy_forward.1} parent=1 // pred_region
      _
    $region29: #{action_policy_forward.1} parent=1 // pred_fallthru
      _
    // Predicated region
    $region30: #{action_policy_forward.1} parent=1 // pred_check
      _
    $region31: #{action_policy_forward.1} parent=1 // pred_check_branch
      %51 = sbr.rel (0) target = $region33
    $region32: #{action_policy_forward.1} parent=1 // pred_region
      %53 = dma.done [#allocation3], 1024
    $region33: #{action_policy_forward.1} parent=1 // pred_fallthru
      _
    // Predicated region
    $region34: #{action_policy_forward.1} parent=1 // pred_check
      _
    $region35: #{action_policy_forward.1} parent=1 // pred_check_branch
      %55 = sbr.rel (0) target = $region37
    $region36: #{action_policy_forward.1} parent=1 // pred_region
      %57 = dma.done [#allocation5], 1024
    $region37: #{action_policy_forward.1} parent=1 // pred_fallthru
      _
    %v59 = vld [vmem:[%s0] sm:$0xff]
    %v60 = vld [vmem:[%s0 + $0x8] sm:$0xff]
    %v61 = vpack.c.bf16 %v60, %v59
    %v62 = vld [vmem:[%s1] sm:$0xf]
    %v63 = vld [vmem:[%s1 + $0x4] sm:$0xf]
    %v64 = vld [vmem:[%s2] sm:$0x1]
    %v66 = vperm.slane %v64, 0
    %v70 = vunpack.c.l.b16 %v62
    %v71 = vunpack.c.l.b16 %v63
    %v72 = vpack.c.b16 %v71, %v70
    %vm74 = vcmask 130048
    %v76 = vsel %vm74, %v61, 0
    %78 = vmatpush.bf16.msra.mxu0 0
    %79 = vmatpush.bf16.msra.mxu0 0
    %80 = vmatpush.bf16.msra.mxu0 0
    %81 = vmatpush.bf16.msra.mxu0 0
    %82 = vmatpush.bf16.msra.mxu0 0
    %83 = vmatpush.bf16.msra.mxu0 0
    %84 = vmatpush.bf16.msra.mxu0 0
    %85 = vmatpush.bf16.msra.mxu0 %v72
    %86 = vmatmul.bf16.gmra.mxu0 %v76
    %v87 = vpop.f32.mrf.mxu0
    %v88 = vadd.f32 %v66, %v87
    %v89 = vpop.f32.mrf.mxu0
    %v90 = vadd.f32 %v66, %v89
    %91 = vdwg.mxu0
    %v92 = vmax.f32 %v88, 0.0
    %v93 = vmax.f32 %v90, 0.0
    %v94 = vpack.c.bf16 %v93, %v92
    %v95 = vld [vmem:[#allocation2] sm:$0xf]
    %v96 = vld [vmem:[#allocation2 + $0x4] sm:$0xf]
    %v97 = vld [vmem:[#allocation2 + $0x8] sm:$0xf]
    %v98 = vld [vmem:[#allocation2 + $0xc] sm:$0xf]
    %v99 = vld [vmem:[#allocation2 + $0x10] sm:$0xf]
    %v100 = vld [vmem:[#allocation2 + $0x14] sm:$0xf]
    %v101 = vld [vmem:[#allocation2 + $0x18] sm:$0xf]
    %v102 = vld [vmem:[#allocation2 + $0x1c] sm:$0xf]
    %v103 = vld [vmem:[#allocation2 + $0x20] sm:$0xf]
    %v104 = vld [vmem:[#allocation2 + $0x24] sm:$0xf]
    %v105 = vld [vmem:[#allocation2 + $0x28] sm:$0xf]
    %v106 = vld [vmem:[#allocation2 + $0x2c] sm:$0xf]
    %v107 = vld [vmem:[#allocation2 + $0x30] sm:$0xf]
    %v108 = vld [vmem:[#allocation2 + $0x34] sm:$0xf]
    %v109 = vld [vmem:[#allocation2 + $0x38] sm:$0xf]
    %v110 = vld [vmem:[#allocation2 + $0x3c] sm:$0xf]
    %v111 = vld [vmem:[%s4] sm:$0x1]
    %v113 = vperm.slane %v111, 0
    %v131 = vunpack.c.l.b16 %v95
    %v132 = vunpack.c.l.b16 %v96
    %v133 = vunpack.c.l.b16 %v97
    %v134 = vunpack.c.l.b16 %v98
    %v135 = vunpack.c.l.b16 %v99
    %v136 = vunpack.c.l.b16 %v100
    %v137 = vunpack.c.l.b16 %v101
    %v138 = vunpack.c.l.b16 %v102
    %v139 = vunpack.c.l.b16 %v103
    %v140 = vunpack.c.l.b16 %v104
    %v141 = vunpack.c.l.b16 %v105
    %v142 = vunpack.c.l.b16 %v106
    %v143 = vunpack.c.l.b16 %v107
    %v144 = vunpack.c.l.b16 %v108
    %v145 = vunpack.c.l.b16 %v109
    %v146 = vunpack.c.l.b16 %v110
    %v147 = vpack.c.b16 %v132, %v131
    %v148 = vpack.c.b16 %v134, %v133
    %v149 = vpack.c.b16 %v136, %v135
    %v150 = vpack.c.b16 %v138, %v137
    %v151 = vpack.c.b16 %v140, %v139
    %v152 = vpack.c.b16 %v142, %v141
    %v153 = vpack.c.b16 %v144, %v143
    %v154 = vpack.c.b16 %v146, %v145
    %163 = vmatpush.bf16.msra.mxu0 %v154
    %164 = vmatpush.bf16.msra.mxu0 %v153
    %165 = vmatpush.bf16.msra.mxu0 %v152
    %166 = vmatpush.bf16.msra.mxu0 %v151
    %167 = vmatpush.bf16.msra.mxu0 %v150
    %168 = vmatpush.bf16.msra.mxu0 %v149
    %169 = vmatpush.bf16.msra.mxu0 %v148
    %170 = vmatpush.bf16.msra.mxu0 %v147
    %171 = vmatmul.bf16.gmra.mxu0 %v94
    %v172 = vpop.f32.mrf.mxu0
    %v173 = vadd.f32 %v113, %v172
    %v174 = vpop.f32.mrf.mxu0
    %v175 = vadd.f32 %v113, %v174
    %176 = vdwg.mxu0
    %v177 = vmax.f32 %v173, 0.0
    %v178 = vmax.f32 %v175, 0.0
    %v179 = vpack.c.bf16 %v178, %v177
    %v180 = vld [vmem:[#allocation4] sm:$0xf]
    %v181 = vld [vmem:[#allocation4 + $0x4] sm:$0xf]
    %v182 = vld [vmem:[#allocation4 + $0x8] sm:$0xf]
    %v183 = vld [vmem:[#allocation4 + $0xc] sm:$0xf]
    %v184 = vld [vmem:[#allocation4 + $0x10] sm:$0xf]
    %v185 = vld [vmem:[#allocation4 + $0x14] sm:$0xf]
    %v186 = vld [vmem:[#allocation4 + $0x18] sm:$0xf]
    %v187 = vld [vmem:[#allocation4 + $0x1c] sm:$0xf]
    %v188 = vld [vmem:[#allocation4 + $0x20] sm:$0xf]
    %v189 = vld [vmem:[#allocation4 + $0x24] sm:$0xf]
    %v190 = vld [vmem:[#allocation4 + $0x28] sm:$0xf]
    %v191 = vld [vmem:[#allocation4 + $0x2c] sm:$0xf]
    %v192 = vld [vmem:[#allocation4 + $0x30] sm:$0xf]
    %v193 = vld [vmem:[#allocation4 + $0x34] sm:$0xf]
    %v194 = vld [vmem:[#allocation4 + $0x38] sm:$0xf]
    %v195 = vld [vmem:[#allocation4 + $0x3c] sm:$0xf]
    %v212 = vunpack.c.l.b16 %v180
    %v213 = vunpack.c.l.b16 %v181
    %v214 = vunpack.c.l.b16 %v182
    %v215 = vunpack.c.l.b16 %v183
    %v216 = vunpack.c.l.b16 %v184
    %v217 = vunpack.c.l.b16 %v185
    %v218 = vunpack.c.l.b16 %v186
    %v219 = vunpack.c.l.b16 %v187
    %v220 = vunpack.c.l.b16 %v188
    %v221 = vunpack.c.l.b16 %v189
    %v222 = vunpack.c.l.b16 %v190
    %v223 = vunpack.c.l.b16 %v191
    %v224 = vunpack.c.l.b16 %v192
    %v225 = vunpack.c.l.b16 %v193
    %v226 = vunpack.c.l.b16 %v194
    %v227 = vunpack.c.l.b16 %v195
    %v228 = vpack.c.b16 %v213, %v212
    %v229 = vpack.c.b16 %v215, %v214
    %v230 = vpack.c.b16 %v217, %v216
    %v231 = vpack.c.b16 %v219, %v218
    %v232 = vpack.c.b16 %v221, %v220
    %v233 = vpack.c.b16 %v223, %v222
    %v234 = vpack.c.b16 %v225, %v224
    %v235 = vpack.c.b16 %v227, %v226
    %244 = vmatpush.bf16.msra.mxu0 %v235
    %245 = vmatpush.bf16.msra.mxu0 %v234
    %246 = vmatpush.bf16.msra.mxu0 %v233
    %247 = vmatpush.bf16.msra.mxu0 %v232
    %248 = vmatpush.bf16.msra.mxu0 %v231
    %249 = vmatpush.bf16.msra.mxu0 %v230
    %250 = vmatpush.bf16.msra.mxu0 %v229
    %251 = vmatpush.bf16.msra.mxu0 %v228
    %252 = vmatmul.bf16.gmra.mxu0 %v179
    %v253 = vpop.f32.mrf.mxu0
    %v254 = vadd.f32 0.0, %v253
    %v255 = vpop.f32.mrf.mxu0
    %v256 = vadd.f32 0.0, %v255
    %257 = vdwg.mxu0
    %v258 = vld [vmem:[%s6] sm:$0x1]
    %v260 = vperm.slane %v258, 0
    %v262 = vadd.f32 %v254, %v260
    %v263 = vadd.f32 %v256, %v260
    %vm264 = vcmask 64512
    %265 = vst.msk [vmem:[%s7] sm:$0xff] %vm264, %v262
    %266 = vst.msk [vmem:[%s7 + $0x8] sm:$0xff] %vm264, %v263
    // Predicated region
    $region38: #{action_policy_forward.1} parent=1 // pred_check
      _
    $region39: #{action_policy_forward.1} parent=1 // pred_check_branch
      %268 = sbr.rel (0) target = $region41
    $region40: #{action_policy_forward.1} parent=1 // pred_region
      _
    $region41: #{action_policy_forward.1} parent=1 // pred_fallthru
      _
    // Predicated region
    $region42: #{action_policy_forward.1} parent=1 // pred_check
      _
    $region43: #{action_policy_forward.1} parent=1 // pred_check_branch
      %270 = sbr.rel (0) target = $region45
    $region44: #{action_policy_forward.1} parent=1 // pred_region
      _
    $region45: #{action_policy_forward.1} parent=1 // pred_fallthru
      _
    %271 = vsyncpa [#allocation3], 1
    %272 = vsyncpa [#allocation5], 1

</llo_original>
